<compile_context>
chip_gen: v5e
topology: v5e:2x2
jax: 0.10.0
libtpu: 0.0.40
codegen_flags: <defaults>
</compile_context>

<pallas_src>
import jax
import jax.numpy as jnp
from jax.experimental import pallas as pl
from jax.experimental.pallas import tpu as pltpu

# ---- config mirroring the PyTorch module's cfg ----
ACTION_SPACE = 8
TEMPORAL_CTX = ACTION_SPACE + 1                                   # = 9
TEMPORAL_CONTEXT = True
FEATURE_DIM = 133 + TEMPORAL_CTX if TEMPORAL_CONTEXT else 133     # = 142
HIDDEN = 256
OUTPUT_SIZE = ACTION_SPACE                                        # Q-values


def _round_up(x, m):
    return ((x + m - 1) // m) * m


def _dqn_kernel(x_ref, w1_ref, b1_ref, w2_ref, b2_ref, o_ref):
    # x_ref:  (TB, K_in) f32    w1_ref: (K_in, 256) bf16 (rows >= FEATURE_DIM are 0)
    # b1_ref: (1, 256)  f32     w2_ref: (256, 8) f32       b2_ref: (1, 8) f32
    x_bf = x_ref[...].astype(jnp.bfloat16)
    # hidden = relu(x @ W1 + b1): bf16 MXU matmul, f32 accumulate, f32 epilogue.
    h = jnp.dot(x_bf, w1_ref[...], preferred_element_type=jnp.float32)
    h = jnp.maximum(h + b1_ref[...], 0.0)
    # output = h @ W2 + b2 (N=8 is tiny; kept fused on the f32 accumulator).
    out = jnp.dot(h, w2_ref[...], preferred_element_type=jnp.float32)
    o_ref[...] = (out + b2_ref[...]).astype(o_ref.dtype)


def dqn_forward(inputs, w1, b1, w2, b2, *, block_b=2048):
    """inputs: (B, input_size >= FEATURE_DIM) f32 -> (B, OUTPUT_SIZE) f32."""
    B, K_in = inputs.shape
    assert K_in >= FEATURE_DIM

    # Fold the `inputs[:, :FEATURE_DIM]` slice into W1: zero-pad its rows so
    # inputs @ W1_pad == inputs[:, :FEATURE_DIM] @ W1.  Pre-cast to bf16 (tiny).
    w1_pad = jnp.zeros((K_in, HIDDEN), jnp.bfloat16)
    w1_pad = w1_pad.at[:FEATURE_DIM, :].set(w1.astype(jnp.bfloat16))
    b1_2d = jnp.reshape(b1, (1, HIDDEN)).astype(jnp.float32)
    w2_f = w2.astype(jnp.float32)
    b2_2d = jnp.reshape(b2, (1, OUTPUT_SIZE)).astype(jnp.float32)

    # Batch tile: multiple of 8 (f32 sublane).  2048 fits v5e's 16 MiB default
    # scoped VMEM; v6e/v7x can go 4096-8192 via block_b.
    tb = min(block_b, _round_up(B, 8))
    b_pad = _round_up(B, tb)
    x = inputs if b_pad == B else jnp.pad(inputs, ((0, b_pad - B), (0, 0)))
    grid = (pl.cdiv(b_pad, tb),)

    cost = pl.CostEstimate(
        flops=2 * b_pad * (K_in * HIDDEN + HIDDEN * OUTPUT_SIZE),
        transcendentals=0,
        bytes_accessed=(b_pad * K_in * 4 + b_pad * OUTPUT_SIZE * 4
                        + K_in * HIDDEN * 2 + HIDDEN * OUTPUT_SIZE * 4
                        + (HIDDEN + OUTPUT_SIZE) * 4),
    )

    out = pl.pallas_call(
        _dqn_kernel,
        out_shape=jax.ShapeDtypeStruct((b_pad, OUTPUT_SIZE), jnp.float32),
        grid=grid,
        in_specs=[
            pl.BlockSpec((tb, K_in), lambda i: (i, 0)),             # x (streamed)
            pl.BlockSpec((K_in, HIDDEN), lambda i: (0, 0)),         # W1 (resident)
            pl.BlockSpec((1, HIDDEN), lambda i: (0, 0)),            # b1 (resident)
            pl.BlockSpec((HIDDEN, OUTPUT_SIZE), lambda i: (0, 0)),  # W2 (resident)
            pl.BlockSpec((1, OUTPUT_SIZE), lambda i: (0, 0)),       # b2 (resident)
        ],
        out_specs=pl.BlockSpec((tb, OUTPUT_SIZE), lambda i: (i, 0)),
        compiler_params=pltpu.CompilerParams(
            dimension_semantics=("parallel",)),   # shard batch across TCs on v7x
        cost_estimate=cost,
    )(x, w1_pad, b1_2d, w2_f, b2_2d)

    return out if b_pad == B else out[:B]


def init_params(key):
    """Deterministic init mimicking nn.Linear (uniform +/- 1/sqrt(fan_in))."""
    k1, k2, k3, k4 = jax.random.split(key, 4)
    lim1 = 1.0 / jnp.sqrt(jnp.float32(FEATURE_DIM))
    lim2 = 1.0 / jnp.sqrt(jnp.float32(HIDDEN))
    w1 = jax.random.uniform(k1, (FEATURE_DIM, HIDDEN), jnp.float32, -lim1, lim1)
    b1 = jax.random.uniform(k2, (1, HIDDEN), jnp.float32, -lim1, lim1)
    w2 = jax.random.uniform(k3, (HIDDEN, OUTPUT_SIZE), jnp.float32, -lim2, lim2)
    b2 = jax.random.uniform(k4, (1, OUTPUT_SIZE), jnp.float32, -lim2, lim2)
    return w1, b1, w2, b2


if __name__ == "__main__":
    key = jax.random.PRNGKey(0)
    k_in, k_par = jax.random.split(key)

    B = 4
    INPUT_SIZE = FEATURE_DIM + 8     # extra trailing cols folded away via W1 zero-pad
    inputs = jax.random.normal(k_in, (B, INPUT_SIZE), jnp.float32)
    w1, b1, w2, b2 = init_params(k_par)

    out = jax.block_until_ready(dqn_forward(inputs, w1, b1, w2, b2))

    # pure-JAX f32 reference; kernel runs the first matmul in bf16 (f32 accumulate),
    # so use a tolerance appropriate for bf16 operand rounding.
    x = inputs[:, :FEATURE_DIM]
    ref = jnp.maximum(x @ w1 + b1, 0.0) @ w2 + b2
    assert out.shape == (B, OUTPUT_SIZE)
    assert jnp.allclose(out, ref, atol=5e-2, rtol=5e-2), (
        float(jnp.max(jnp.abs(out - ref))))

    print("KERNEL_OK")
</pallas_src>

<mosaic_0001>
module attributes {stable_mosaic.version = 11 : i64} {
  func.func @_dqn_kernel(%arg0: i32, %arg1: memref<8x150xf32, #tpu.memory_space<vmem>>, %arg2: memref<150x256xbf16, #tpu.memory_space<vmem>>, %arg3: memref<1x256xf32, #tpu.memory_space<vmem>>, %arg4: memref<256x8xf32, #tpu.memory_space<vmem>>, %arg5: memref<1x8xf32, #tpu.memory_space<vmem>>, %arg6: memref<8x8xf32, #tpu.memory_space<vmem>>) attributes {dimension_semantics = [#tpu.dimension_semantics<parallel>], iteration_bounds = array<i64: 1>, scalar_prefetch = 0 : i64, scratch_operands = 0 : i64, tpu.core_type = #tpu.core_type<tc>, window_params = [{transform_indices = @transform_0, window_bounds = array<i64: 8, 150>}, {pipeline_mode = #tpu.pipeline_mode<synchronous>, transform_indices = @transform_1, window_bounds = array<i64: 150, 256>}, {pipeline_mode = #tpu.pipeline_mode<synchronous>, transform_indices = @transform_2, window_bounds = array<i64: 1, 256>}, {pipeline_mode = #tpu.pipeline_mode<synchronous>, transform_indices = @transform_3, window_bounds = array<i64: 256, 8>}, {pipeline_mode = #tpu.pipeline_mode<synchronous>, transform_indices = @transform_4, window_bounds = array<i64: 1, 8>}, {transform_indices = @transform_5, window_bounds = array<i64: 8, 8>}]} {
    %c0 = arith.constant 0 : index
    %c0_0 = arith.constant 0 : index
    %0 = vector.load %arg1[%c0, %c0_0] : memref<8x150xf32, #tpu.memory_space<vmem>>, vector<8x150xf32>
    %1 = arith.truncf %0 : vector<8x150xf32> to vector<8x150xbf16>
    %c0_1 = arith.constant 0 : index
    %c0_2 = arith.constant 0 : index
    %2 = vector.load %arg2[%c0_1, %c0_2] : memref<150x256xbf16, #tpu.memory_space<vmem>>, vector<150x256xbf16>
    %cst = arith.constant dense<0.000000e+00> : vector<8x256xf32>
    %3 = tpu.matmul %1, %2, %cst {dimension_numbers = #tpu.dot_dimension_numbers<[1], [0], [0], [1], [0, 0, 1, 1], [], []>} : vector<8x150xbf16>, vector<150x256xbf16>, vector<8x256xf32> -> vector<8x256xf32>
    %c0_3 = arith.constant 0 : index
    %c0_4 = arith.constant 0 : index
    %4 = vector.load %arg3[%c0_3, %c0_4] : memref<1x256xf32, #tpu.memory_space<vmem>>, vector<1x256xf32>
    %5 = vector.broadcast %4 : vector<1x256xf32> to vector<8x256xf32>
    %6 = arith.addf %3, %5 : vector<8x256xf32>
    %cst_5 = arith.constant 0.000000e+00 : f32
    %7 = vector.broadcast %cst_5 : f32 to vector<8x256xf32>
    %8 = arith.maximumf %6, %7 : vector<8x256xf32>
    %c0_6 = arith.constant 0 : index
    %c0_7 = arith.constant 0 : index
    %9 = vector.load %arg4[%c0_6, %c0_7] : memref<256x8xf32, #tpu.memory_space<vmem>>, vector<256x8xf32>
    %cst_8 = arith.constant dense<0.000000e+00> : vector<8x8xf32>
    %10 = tpu.matmul %8, %9, %cst_8 {dimension_numbers = #tpu.dot_dimension_numbers<[1], [0], [0], [1], [0, 0, 1, 1], [], []>} : vector<8x256xf32>, vector<256x8xf32>, vector<8x8xf32> -> vector<8x8xf32>
    %c0_9 = arith.constant 0 : index
    %c0_10 = arith.constant 0 : index
    %11 = vector.load %arg5[%c0_9, %c0_10] : memref<1x8xf32, #tpu.memory_space<vmem>>, vector<1x8xf32>
    %12 = vector.broadcast %11 : vector<1x8xf32> to vector<8x8xf32>
    %13 = arith.addf %10, %12 : vector<8x8xf32>
    %c0_11 = arith.constant 0 : index
    %c0_12 = arith.constant 0 : index
    %14 = vector.load %arg6[%c0_11, %c0_12] : memref<8x8xf32, #tpu.memory_space<vmem>>, vector<8x8xf32>
    tpu.vector_store %arg6[%c0_11, %c0_12], %13 {strides = array<i32>} : memref<8x8xf32, #tpu.memory_space<vmem>>, vector<8x8xf32>,
    return
  }
  func.func @transform_0(%arg0: i32) -> (i32, i32) {
    %c0_i32 = arith.constant 0 : i32
    %c0_i32_0 = arith.constant 0 : i32
    return %arg0, %c0_i32 : i32, i32
  }
  func.func @transform_1(%arg0: i32) -> (i32, i32) {
    %c0_i32 = arith.constant 0 : i32
    %c0_i32_0 = arith.constant 0 : i32
    %c0_i32_1 = arith.constant 0 : i32
    return %c0_i32, %c0_i32_0 : i32, i32
  }
  func.func @transform_2(%arg0: i32) -> (i32, i32) {
    %c0_i32 = arith.constant 0 : i32
    %c0_i32_0 = arith.constant 0 : i32
    %c0_i32_1 = arith.constant 0 : i32
    return %c0_i32, %c0_i32_0 : i32, i32
  }
  func.func @transform_3(%arg0: i32) -> (i32, i32) {
    %c0_i32 = arith.constant 0 : i32
    %c0_i32_0 = arith.constant 0 : i32
    %c0_i32_1 = arith.constant 0 : i32
    return %c0_i32, %c0_i32_0 : i32, i32
  }
  func.func @transform_4(%arg0: i32) -> (i32, i32) {
    %c0_i32 = arith.constant 0 : i32
    %c0_i32_0 = arith.constant 0 : i32
    %c0_i32_1 = arith.constant 0 : i32
    return %c0_i32, %c0_i32_0 : i32, i32
  }
  func.func @transform_5(%arg0: i32) -> (i32, i32) {
    %c0_i32 = arith.constant 0 : i32
    %c0_i32_0 = arith.constant 0 : i32
    return %arg0, %c0_i32 : i32, i32
  }
}

</mosaic_0001>

<llo_original>
// kernel: tpu_custom_call.1
$region0: #{tpu_custom_call.1}
  #allocation0 [shape = 'u32[]', space=smem, size = 0x4, offset = 0x4, fixed_abs, tag = 'smem constant byte address 0x4 - core index']
  #allocation1 [shape = 'u32[72,128]{1,0:T(1,128)}', space=vmem, size = 0x9000, scoped, tag = 'internal scratch']
  %s0 = inlined_call_operand.vmem [shape: f32[8,150], index: 0, kind: input, shape index: {}]
  %s1 = inlined_call_operand.vmem [shape: bf16[150,256], index: 1, kind: input, shape index: {}]
  %s2 = inlined_call_operand.vmem [shape: f32[1,256], index: 2, kind: input, shape index: {}]
  %s3 = inlined_call_operand.vmem [shape: f32[256,8], index: 3, kind: input, shape index: {}]
  %s4 = inlined_call_operand.vmem [shape: f32[1,8], index: 4, kind: input, shape index: {}]
  %s5 = inlined_call_operand.hbm [shape: f32[8,8], index: 5, kind: output, shape index: {}]
  %s6 = sld [smem:[#allocation0]]
  $region30: #{tpu_custom_call.1} parent=0
    _
  %s8 = ssub.s32 1, %s6
  %s9 = scalar_select 0, %s8, %s6
  $region1: #{tpu_custom_call.1} parent=0
    #allocation2 [shape = 'u8[4096]{0}', space=vmem, size = 0x1000, scoped, tag = 'output window, operand 0, single buffered']
    #allocation3 [shape = 's32[1]{0}', space=sflag, size = 0x4, scoped, tag = 'scoped memory for tpu_custom_call.1']
    %10 = vsyncpa [#allocation3], 0
    // Predicated region
    $region2: #{tpu_custom_call.1} parent=1 // pred_check
      _
    $region3: #{tpu_custom_call.1} parent=1 // pred_check_branch
      %12 = sbr.rel (0) target = $region5
    $region4: #{tpu_custom_call.1} parent=1 // pred_region
      _
    $region5: #{tpu_custom_call.1} parent=1 // pred_fallthru
      _
    // Predicated region
    $region6: #{tpu_custom_call.1} parent=1 // pred_check
      _
    $region7: #{tpu_custom_call.1} parent=1 // pred_check_branch
      %14 = sbr.rel (0) target = $region9
    $region8: #{tpu_custom_call.1} parent=1 // pred_region
      _
    $region9: #{tpu_custom_call.1} parent=1 // pred_fallthru
      _
    // Predicated region
    $region10: #{tpu_custom_call.1} parent=1 // pred_check
      _
    $region11: #{tpu_custom_call.1} parent=1 // pred_check_branch
      %16 = sbr.rel (0) target = $region13
    $region12: #{tpu_custom_call.1} parent=1 // pred_region
      _
    $region13: #{tpu_custom_call.1} parent=1 // pred_fallthru
      _
    // Predicated region
    $region14: #{tpu_custom_call.1} parent=1 // pred_check
      _
    $region15: #{tpu_custom_call.1} parent=1 // pred_check_branch
      %18 = sbr.rel (0) target = $region17
    $region16: #{tpu_custom_call.1} parent=1 // pred_region
      _
    $region17: #{tpu_custom_call.1} parent=1 // pred_fallthru
      _
    // Predicated region
    $region18: #{tpu_custom_call.1} parent=1 // pred_check
      _
    $region19: #{tpu_custom_call.1} parent=1 // pred_check_branch
      %20 = sbr.rel (0) target = $region21
    $region20: #{tpu_custom_call.1} parent=1 // pred_region
      _
    $region21: #{tpu_custom_call.1} parent=1 // pred_fallthru
      _
    %v22 = vld [vmem:[%s0] sm:$0xff]
    %v23 = vld [vmem:[%s0 + $0x8] sm:$0xff]
    %v24 = vpack.c.bf16 %v22, %v22
    %v25 = vpack.c.bf16 %v23, %v23
    %v26 = vld [vmem:[%s1] sm:$0xff]
    %v27 = vld [vmem:[%s1 + $0x8] sm:$0xff]
    %v28 = vld [vmem:[%s1 + $0x10] sm:$0xff]
    %v29 = vld [vmem:[%s1 + $0x18] sm:$0xff]
    %v30 = vld [vmem:[%s1 + $0x20] sm:$0xff]
    %v31 = vld [vmem:[%s1 + $0x28] sm:$0xff]
    %v32 = vld [vmem:[%s1 + $0x30] sm:$0xff]
    %v33 = vld [vmem:[%s1 + $0x38] sm:$0xff]
    %v34 = vld [vmem:[%s1 + $0x40] sm:$0xff]
    %v35 = vld [vmem:[%s1 + $0x48] sm:$0xff]
    %v36 = vld [vmem:[%s1 + $0x50] sm:$0xff]
    %v37 = vld [vmem:[%s1 + $0x58] sm:$0xff]
    %v38 = vld [vmem:[%s1 + $0x60] sm:$0xff]
    %v39 = vld [vmem:[%s1 + $0x68] sm:$0xff]
    %v40 = vld [vmem:[%s1 + $0x70] sm:$0xff]
    %v41 = vld [vmem:[%s1 + $0x78] sm:$0xff]
    %v42 = vld [vmem:[%s1 + $0x80] sm:$0xff]
    %v43 = vld [vmem:[%s1 + $0x88] sm:$0xff]
    %v44 = vld [vmem:[%s1 + $0x90] sm:$0x77]
    %v45 = vld [vmem:[%s2] sm:$0x3]
    %v47 = vperm.slane %v45, 0
    %v48 = vperm.slane %v45, 1
    %v70 = vunpack.c.l.b16 %v26
    %v71 = vunpack.c.h.b16 %v26
    %v72 = vunpack.c.l.b16 %v27
    %v73 = vunpack.c.h.b16 %v27
    %v74 = vunpack.c.l.b16 %v28
    %v75 = vunpack.c.h.b16 %v28
    %v76 = vunpack.c.l.b16 %v29
    %v77 = vunpack.c.h.b16 %v29
    %v78 = vunpack.c.l.b16 %v30
    %v79 = vunpack.c.h.b16 %v30
    %v80 = vunpack.c.l.b16 %v31
    %v81 = vunpack.c.h.b16 %v31
    %v82 = vunpack.c.l.b16 %v32
    %v83 = vunpack.c.h.b16 %v32
    %v84 = vunpack.c.l.b16 %v33
    %v85 = vunpack.c.h.b16 %v33
    %v86 = vunpack.c.l.b16 %v34
    %v87 = vunpack.c.h.b16 %v34
    %v88 = vunpack.c.l.b16 %v35
    %v89 = vunpack.c.h.b16 %v35
    %v90 = vunpack.c.l.b16 %v36
    %v91 = vunpack.c.h.b16 %v36
    %v92 = vunpack.c.l.b16 %v37
    %v93 = vunpack.c.h.b16 %v37
    %v94 = vunpack.c.l.b16 %v38
    %v95 = vunpack.c.h.b16 %v38
    %v96 = vunpack.c.l.b16 %v39
    %v97 = vunpack.c.h.b16 %v39
    %v98 = vunpack.c.l.b16 %v40
    %v99 = vunpack.c.h.b16 %v40
    %v100 = vunpack.c.l.b16 %v41
    %v101 = vunpack.c.h.b16 %v41
    %v102 = vunpack.c.l.b16 %v42
    %v103 = vunpack.c.h.b16 %v42
    %v104 = vunpack.c.l.b16 %v43
    %v105 = vunpack.c.h.b16 %v43
    %v106 = vunpack.c.l.b16 %v44
    %v107 = vunpack.c.h.b16 %v44
    %v108 = vpack.c.b16 %v72, %v70
    %v109 = vpack.c.b16 %v73, %v71
    %v110 = vpack.c.b16 %v76, %v74
    %v111 = vpack.c.b16 %v77, %v75
    %v112 = vpack.c.b16 %v80, %v78
    %v113 = vpack.c.b16 %v81, %v79
    %v114 = vpack.c.b16 %v84, %v82
    %v115 = vpack.c.b16 %v85, %v83
    %v116 = vpack.c.b16 %v88, %v86
    %v117 = vpack.c.b16 %v89, %v87
    %v118 = vpack.c.b16 %v92, %v90
    %v119 = vpack.c.b16 %v93, %v91
    %v120 = vpack.c.b16 %v96, %v94
    %v121 = vpack.c.b16 %v97, %v95
    %v122 = vpack.c.b16 %v100, %v98
    %v123 = vpack.c.b16 %v101, %v99
    %v124 = vpack.c.b16 %v104, %v102
    %v125 = vpack.c.b16 %v105, %v103
    %v126 = vpack.c.b16 %v106, %v106
    %v127 = vpack.c.b16 %v107, %v107
    %vm146 = vcmask 179200
    %v148 = vsel %vm146, %v25, 0
    %vm150 = vcmask 1042432
    %v152 = vsel %vm150, %v126, 0
    %v155 = vsel %vm150, %v127, 0
    %157 = vmatpush.bf16.msra.mxu0 %v122
    %158 = vmatpush.bf16.msra.mxu0 %v120
    %159 = vmatpush.bf16.msra.mxu0 %v118
    %160 = vmatpush.bf16.msra.mxu0 %v116
    %161 = vmatpush.bf16.msra.mxu0 %v114
    %162 = vmatpush.bf16.msra.mxu0 %v112
    %163 = vmatpush.bf16.msra.mxu0 %v110
    %164 = vmatpush.bf16.msra.mxu0 %v108
    %165 = vmatmul.bf16.gmra.mxu0 %v24
    %v166 = vpop.f32.mrf.mxu0
    %v167 = vadd.f32 %v47, %v166
    %v168 = vpop.f32.mrf.mxu0
    %169 = vdwg.mxu0
    %170 = vmatpush.bf16.msra.mxu0 0
    %171 = vmatpush.bf16.msra.mxu0 0
    %172 = vmatpush.bf16.msra.mxu0 0
    %173 = vmatpush.bf16.msra.mxu0 0
    %174 = vmatpush.bf16.msra.mxu0 0
    %175 = vmatpush.bf16.msra.mxu0 0
    %176 = vmatpush.bf16.msra.mxu0 %v152
    %177 = vmatpush.bf16.msra.mxu0 %v124
    %178 = vmatmul.bf16.gmra.mxu0 %v148
    %v179 = vpop.f32.mrf.mxu0
    %v180 = vadd.f32 %v167, %v179
    %v181 = vpop.f32.mrf.mxu0
    %182 = vdwg.mxu0
    %183 = vmatpush.bf16.msra.mxu0 %v123
    %184 = vmatpush.bf16.msra.mxu0 %v121
    %185 = vmatpush.bf16.msra.mxu0 %v119
    %186 = vmatpush.bf16.msra.mxu0 %v117
    %187 = vmatpush.bf16.msra.mxu0 %v115
    %188 = vmatpush.bf16.msra.mxu0 %v113
    %189 = vmatpush.bf16.msra.mxu0 %v111
    %190 = vmatpush.bf16.msra.mxu0 %v109
    %191 = vmatmul.bf16.gmra.mxu0 %v24
    %v192 = vpop.f32.mrf.mxu0
    %v193 = vadd.f32 %v48, %v192
    %v194 = vpop.f32.mrf.mxu0
    %195 = vdwg.mxu0
    %196 = vmatpush.bf16.msra.mxu0 0
    %197 = vmatpush.bf16.msra.mxu0 0
    %198 = vmatpush.bf16.msra.mxu0 0
    %199 = vmatpush.bf16.msra.mxu0 0
    %200 = vmatpush.bf16.msra.mxu0 0
    %201 = vmatpush.bf16.msra.mxu0 0
    %202 = vmatpush.bf16.msra.mxu0 %v155
    %203 = vmatpush.bf16.msra.mxu0 %v125
    %204 = vmatmul.bf16.gmra.mxu0 %v148
    %v205 = vpop.f32.mrf.mxu0
    %v206 = vadd.f32 %v193, %v205
    %v207 = vpop.f32.mrf.mxu0
    %208 = vdwg.mxu0
    %v209 = vmax.f32 %v180, 0.0
    %v210 = vmax.f32 %v206, 0.0
    %v211 = vld [vmem:[%s3] sm:$0xff]
    %v212 = vld [vmem:[%s3 + $0x8] sm:$0xff]
    %v213 = vld [vmem:[%s3 + $0x10] sm:$0xff]
    %v214 = vld [vmem:[%s3 + $0x18] sm:$0xff]
    %v215 = vld [vmem:[%s3 + $0x20] sm:$0xff]
    %v216 = vld [vmem:[%s3 + $0x28] sm:$0xff]
    %v217 = vld [vmem:[%s3 + $0x30] sm:$0xff]
    %v218 = vld [vmem:[%s3 + $0x38] sm:$0xff]
    %v219 = vld [vmem:[%s3 + $0x40] sm:$0xff]
    %v220 = vld [vmem:[%s3 + $0x48] sm:$0xff]
    %v221 = vld [vmem:[%s3 + $0x50] sm:$0xff]
    %v222 = vld [vmem:[%s3 + $0x58] sm:$0xff]
    %v223 = vld [vmem:[%s3 + $0x60] sm:$0xff]
    %v224 = vld [vmem:[%s3 + $0x68] sm:$0xff]
    %v225 = vld [vmem:[%s3 + $0x70] sm:$0xff]
    %v226 = vld [vmem:[%s3 + $0x78] sm:$0xff]
    %v227 = vld [vmem:[%s3 + $0x80] sm:$0xff]
    %v228 = vld [vmem:[%s3 + $0x88] sm:$0xff]
    %v229 = vld [vmem:[%s3 + $0x90] sm:$0xff]
    %v230 = vld [vmem:[%s3 + $0x98] sm:$0xff]
    %v231 = vld [vmem:[%s3 + $0xa0] sm:$0xff]
    %v232 = vld [vmem:[%s3 + $0xa8] sm:$0xff]
    %v233 = vld [vmem:[%s3 + $0xb0] sm:$0xff]
    %v234 = vld [vmem:[%s3 + $0xb8] sm:$0xff]
    %v235 = vld [vmem:[%s3 + $0xc0] sm:$0xff]
    %v236 = vld [vmem:[%s3 + $0xc8] sm:$0xff]
    %v237 = vld [vmem:[%s3 + $0xd0] sm:$0xff]
    %v238 = vld [vmem:[%s3 + $0xd8] sm:$0xff]
    %v239 = vld [vmem:[%s3 + $0xe0] sm:$0xff]
    %v240 = vld [vmem:[%s3 + $0xe8] sm:$0xff]
    %v241 = vld [vmem:[%s3 + $0xf0] sm:$0xff]
    %v242 = vld [vmem:[%s3 + $0xf8] sm:$0xff]
    %v243 = vld [vmem:[%s4] sm:$0x1]
    %v245 = vperm.slane %v243, 0
    %247 = vmatpush.msra.mxu0 %v226
    %248 = vmatpush.msra.mxu0 %v225
    %249 = vmatpush.msra.mxu0 %v224
    %250 = vmatpush.msra.mxu0 %v223
    %251 = vmatpush.msra.mxu0 %v222
    %252 = vmatpush.msra.mxu0 %v221
    %253 = vmatpush.msra.mxu0 %v220
    %254 = vmatpush.msra.mxu0 %v219
    %255 = vmatpush.msra.mxu0 %v218
    %256 = vmatpush.msra.mxu0 %v217
    %257 = vmatpush.msra.mxu0 %v216
    %258 = vmatpush.msra.mxu0 %v215
    %259 = vmatpush.msra.mxu0 %v214
    %260 = vmatpush.msra.mxu0 %v213
    %261 = vmatpush.msra.mxu0 %v212
    %262 = vmatpush.msra.mxu0 %v211
    %263 = vmatmul.f32.gmra.mxu0 %v209
    %v264 = vpop.f32.mrf.mxu0
    %v265 = vadd.f32 %v245, %v264
    %266 = vdwg.mxu0
    %267 = vmatpush.msra.mxu0 %v242
    %268 = vmatpush.msra.mxu0 %v241
    %269 = vmatpush.msra.mxu0 %v240
    %270 = vmatpush.msra.mxu0 %v239
    %271 = vmatpush.msra.mxu0 %v238
    %272 = vmatpush.msra.mxu0 %v237
    %273 = vmatpush.msra.mxu0 %v236
    %274 = vmatpush.msra.mxu0 %v235
    %275 = vmatpush.msra.mxu0 %v234
    %276 = vmatpush.msra.mxu0 %v233
    %277 = vmatpush.msra.mxu0 %v232
    %278 = vmatpush.msra.mxu0 %v231
    %279 = vmatpush.msra.mxu0 %v230
    %280 = vmatpush.msra.mxu0 %v229
    %281 = vmatpush.msra.mxu0 %v228
    %282 = vmatpush.msra.mxu0 %v227
    %283 = vmatmul.f32.gmra.mxu0 %v210
    %v284 = vpop.f32.mrf.mxu0
    %v285 = vadd.f32 %v265, %v284
    %286 = vdwg.mxu0
    %vm287 = vcmask 64512
    %288 = vst.msk [vmem:[#allocation2] sm:$0xff] %vm287, %v285
    // Predicated region
    $region22: #{tpu_custom_call.1} parent=1 // pred_check
      _
    $region23: #{tpu_custom_call.1} parent=1 // pred_check_branch
      %290 = sbr.rel (0) target = $region25
    $region24: #{tpu_custom_call.1} parent=1 // pred_region
      %292 = vsyncadd [#allocation3], 0
      %s294 = sshll.u32 [#allocation2], 4
      %s295 = int_to_ptr.vmem [resolvable:$true] %s294
      %s296 = sshll.u32 %s5, 4
      %s297 = int_to_ptr.hbm [resolvable:$true] %s296
      %299 = dma.vmem_to_hbm [thread:$0]  %s295, 128, %s297, [#allocation3]
    $region25: #{tpu_custom_call.1} parent=1 // pred_fallthru
      _
    // Predicated region
    $region26: #{tpu_custom_call.1} parent=1 // pred_check
      _
    $region27: #{tpu_custom_call.1} parent=1 // pred_check_branch
      %301 = sbr.rel (0) target = $region29
    $region28: #{tpu_custom_call.1} parent=1 // pred_region
      %303 = dma.done [#allocation3], 128
    $region29: #{tpu_custom_call.1} parent=1 // pred_fallthru
      _
    %304 = vsyncpa [#allocation3], 1

</llo_original>
